<compile_context>
chip_gen: v5e
topology: v5e:2x2
jax: 0.10.0
libtpu: 0.0.40
codegen_flags: <defaults>
</compile_context>

<pallas_src>
import functools

import jax
import jax.numpy as jnp
from jax.experimental import pallas as pl
from jax.experimental.pallas import tpu as pltpu

EPS = 1e-5  # PyTorch nn.LayerNorm default


def _layernorm_linear_kernel(x_ref, gamma_ref, beta_ref, wt_ref, b_ref, o_ref,
                             *, gemm_dtype):
    # x_ref: (TILE_ROWS, D) pipelined block of flattened (B*S) tokens.
    # gamma/beta/bias: (1, D) f32; wt_ref: (D, D) = W^T already in gemm_dtype.
    # All constants are single VMEM-resident copies (no per-step DMA or cast).
    x = x_ref[...].astype(jnp.float32)

    # LayerNorm over the feature dim; one fused statistics pass:
    # var = E[x^2] - mean^2 (biased variance, eps=1e-5, matching PyTorch).
    mean = jnp.mean(x, axis=-1, keepdims=True)
    meansq = jnp.mean(x * x, axis=-1, keepdims=True)
    var = meansq - mean * mean
    inv_std = jax.lax.rsqrt(var + EPS)
    y = (x - mean) * inv_std
    y = y * gamma_ref[...] + beta_ref[...]

    # fn = Linear(D, D): y @ W^T + b.  Only the activations get cast here;
    # W^T is already gemm_dtype and accumulation stays f32 on the MXU.
    out = jnp.dot(y.astype(gemm_dtype), wt_ref[...],
                  preferred_element_type=jnp.float32)
    out = out + b_ref[...]
    o_ref[...] = out.astype(o_ref.dtype)


def _round_up(n, m):
    return ((n + m - 1) // m) * m


def _sublane_multiple(dtype):
    # Minimum second-to-last tile dim: 8 (f32), 16 (bf16/f16), 32 (int8/fp8).
    return max(8, 32 // jnp.dtype(dtype).itemsize)


def layer_normalize_fn(x, gamma, beta, w, b, *, tile_rows=512, gemm_dtype=None,
                       vmem_limit_bytes=None, buffering=None):
    """x: (B, S, D). Returns fn(LayerNorm(x)) with fn = Linear(D, D).

    tile_rows: row-tile size (default 512; sweep 512/1024 up to VMEM).
    gemm_dtype: dtype of the GEMM operands only (default bf16 — MXU-native on
                v5e/v6e/v7x).  LN statistics always stay f32.
    buffering: optional pipeline depth for the x/out BlockSpecs (e.g. 3 on
               v7x if profiling shows exposed DMA); None keeps the default.
    """
    B, S, D = x.shape
    rows = B * S
    xf = x.reshape(rows, D)

    if gemm_dtype is None:
        gemm_dtype = jnp.bfloat16
    gemm_dtype = jnp.dtype(gemm_dtype)

    sub = _sublane_multiple(x.dtype)
    # Effective row tile: multiple of the dtype's sublane packing, shrunk for
    # tiny inputs; default 512 is a multiple of 256 for the 256-wide MXU.
    tile_rows_eff = _round_up(min(tile_rows, _round_up(rows, sub)), sub)

    # cdiv grid; Pallas masks the partial last block on writeback, so no
    # host-side pad of x and no trailing slice of the output.  Unspecified
    # rows in the last input block are finite-or-NaN garbage that only lands
    # in their own (discarded) output rows — LN and the matmul are row-wise.
    grid = (pl.cdiv(rows, tile_rows_eff),)

    # Constant operands, cast once on the host.
    gamma2 = gamma.reshape(1, D).astype(jnp.float32)
    beta2 = beta.reshape(1, D).astype(jnp.float32)
    b2 = b.reshape(1, D).astype(jnp.float32)
    wt = jnp.asarray(w).T.astype(gemm_dtype)  # W^T, resident in gemm_dtype

    if vmem_limit_bytes is None:
        x_bytes = jnp.dtype(x.dtype).itemsize
        need = 2 * tile_rows_eff * D * (x_bytes + x_bytes)  # dbl-buffered x/out
        need += D * D * gemm_dtype.itemsize                 # resident W^T
        need += 3 * D * 4                                   # gamma/beta/bias
        need += 4 << 20                                     # compiler scratch slack
        vmem_limit_bytes = max(need, 32 << 20)

    pipe_kwargs = {}
    if buffering is not None:
        pipe_kwargs["pipeline_mode"] = pl.Buffered(buffering)

    kernel = functools.partial(_layernorm_linear_kernel, gemm_dtype=gemm_dtype)

    out = pl.pallas_call(
        kernel,
        out_shape=jax.ShapeDtypeStruct((rows, D), x.dtype),
        grid_spec=pltpu.PrefetchScalarGridSpec(
            num_scalar_prefetch=0,
            grid=grid,
            in_specs=[
                # x: pipelined / double-buffered row tiles.
                pl.BlockSpec((tile_rows_eff, D), lambda i: (i, 0), **pipe_kwargs),
                # Constant operands: single VMEM-resident copy, no pipelining.
                pl.BlockSpec(memory_space=pltpu.MemorySpace.VMEM),  # gamma
                pl.BlockSpec(memory_space=pltpu.MemorySpace.VMEM),  # beta
                pl.BlockSpec(memory_space=pltpu.MemorySpace.VMEM),  # W^T
                pl.BlockSpec(memory_space=pltpu.MemorySpace.VMEM),  # bias
            ],
            out_specs=pl.BlockSpec((tile_rows_eff, D), lambda i: (i, 0),
                                   **pipe_kwargs),
        ),
        compiler_params=pltpu.CompilerParams(
            dimension_semantics=("parallel",),   # shard row tiles across TCs
            vmem_limit_bytes=vmem_limit_bytes,
        ),
    )(xf, gamma2, beta2, wt, b2)

    return out.reshape(B, S, D)


def reference(x, gamma, beta, w, b):
    xf = x.astype(jnp.float32)
    mean = jnp.mean(xf, axis=-1, keepdims=True)
    var = jnp.mean((xf - mean) ** 2, axis=-1, keepdims=True)
    y = (xf - mean) / jnp.sqrt(var + EPS) * gamma + beta
    return (y @ w.T + b).astype(x.dtype)


if __name__ == "__main__":
    # Small shapes implied by the (B, S, D) token-tensor usage of LayerNormalize.
    B, S, D = 2, 8, 32
    key = jax.random.PRNGKey(0)
    kx, kw, kb = jax.random.split(key, 3)

    x = jax.random.normal(kx, (B, S, D), dtype=jnp.float32)

    # nn.LayerNorm init: weight=1, bias=0; fn = Linear(D, D) small random init.
    gamma = jnp.ones((D,), dtype=jnp.float32)
    beta = jnp.zeros((D,), dtype=jnp.float32)
    w = jax.random.normal(kw, (D, D), dtype=jnp.float32) * 0.02
    b = jax.random.normal(kb, (D,), dtype=jnp.float32) * 0.02

    ref = reference(x, gamma, beta, w, b)

    # Default path: bf16 GEMM operands (MXU-native on v5e/v6e/v7x). Looser
    # tolerance is the expected bf16-operand precision tradeoff, not a bug.
    out_bf16 = jax.block_until_ready(layer_normalize_fn(x, gamma, beta, w, b))
    assert out_bf16.shape == (B, S, D)
    assert jnp.allclose(out_bf16, ref, atol=2e-2, rtol=2e-2), "mismatch (bf16 GEMM)"

    # f32 GEMM path: tight tolerance check of the fused LN + Linear math.
    out_f32 = jax.block_until_ready(
        layer_normalize_fn(x, gamma, beta, w, b, gemm_dtype=jnp.float32))
    assert jnp.allclose(out_f32, ref, atol=1e-4, rtol=1e-4), "mismatch (f32 GEMM)"

    # Ragged row count (B*S not a multiple of the sublane-rounded tile):
    # exercises the masked partial last block — no host pad / trailing slice.
    x2 = jax.random.normal(kx, (2, 5, D), dtype=jnp.float32)
    out2 = jax.block_until_ready(
        layer_normalize_fn(x2, gamma, beta, w, b, gemm_dtype=jnp.float32))
    ref2 = reference(x2, gamma, beta, w, b)
    assert out2.shape == (2, 5, D)
    assert jnp.allclose(out2, ref2, atol=1e-4, rtol=1e-4), "mismatch (ragged)"

    print("KERNEL_OK")
</pallas_src>

<mosaic_0001>
module attributes {stable_mosaic.version = 11 : i64} {
  func.func @_layernorm_linear_kernel(%arg0: i32, %arg1: memref<16x32xf32, #tpu.memory_space<vmem>>, %arg2: memref<1x32xf32, #tpu.memory_space<vmem>>, %arg3: memref<1x32xf32, #tpu.memory_space<vmem>>, %arg4: memref<32x32xbf16, #tpu.memory_space<vmem>>, %arg5: memref<1x32xf32, #tpu.memory_space<vmem>>, %arg6: memref<16x32xf32, #tpu.memory_space<vmem>>) attributes {dimension_semantics = [#tpu.dimension_semantics<parallel>], iteration_bounds = array<i64: 1>, scalar_prefetch = 0 : i64, scratch_operands = 0 : i64, tpu.core_type = #tpu.core_type<tc>, window_params = [{transform_indices = @transform_0, window_bounds = array<i64: 16, 32>}, {pipeline_mode = #tpu.pipeline_mode<synchronous>, transform_indices = @transform_1, window_bounds = array<i64: 1, 32>}, {pipeline_mode = #tpu.pipeline_mode<synchronous>, transform_indices = @transform_2, window_bounds = array<i64: 1, 32>}, {pipeline_mode = #tpu.pipeline_mode<synchronous>, transform_indices = @transform_3, window_bounds = array<i64: 32, 32>}, {pipeline_mode = #tpu.pipeline_mode<synchronous>, transform_indices = @transform_4, window_bounds = array<i64: 1, 32>}, {transform_indices = @transform_5, window_bounds = array<i64: 16, 32>}]} {
    %c0 = arith.constant 0 : index
    %c0_0 = arith.constant 0 : index
    %0 = vector.load %arg1[%c0, %c0_0] : memref<16x32xf32, #tpu.memory_space<vmem>>, vector<16x32xf32>
    %cst = arith.constant dense<0.000000e+00> : vector<16xf32>
    %1 = vector.multi_reduction <add>, %0, %cst [1] : vector<16x32xf32> to vector<16xf32>
    %2 = vector.shape_cast %1 : vector<16xf32> to vector<16x1xf32>
    %cst_1 = arith.constant 3.200000e+01 : f32
    %3 = vector.broadcast %cst_1 : f32 to vector<16x1xf32>
    %4 = arith.divf %2, %3 : vector<16x1xf32>
    %5 = arith.mulf %0, %0 : vector<16x32xf32>
    %cst_2 = arith.constant dense<0.000000e+00> : vector<16xf32>
    %6 = vector.multi_reduction <add>, %5, %cst_2 [1] : vector<16x32xf32> to vector<16xf32>
    %7 = vector.shape_cast %6 : vector<16xf32> to vector<16x1xf32>
    %cst_3 = arith.constant 3.200000e+01 : f32
    %8 = vector.broadcast %cst_3 : f32 to vector<16x1xf32>
    %9 = arith.divf %7, %8 : vector<16x1xf32>
    %10 = arith.mulf %4, %4 : vector<16x1xf32>
    %11 = arith.subf %9, %10 : vector<16x1xf32>
    %cst_4 = arith.constant 9.99999974E-6 : f32
    %12 = vector.broadcast %cst_4 : f32 to vector<16x1xf32>
    %13 = arith.addf %11, %12 : vector<16x1xf32>
    %14 = math.rsqrt %13 : vector<16x1xf32>
    %15 = vector.broadcast %4 : vector<16x1xf32> to vector<16x32xf32>
    %16 = arith.subf %0, %15 : vector<16x32xf32>
    %17 = vector.broadcast %14 : vector<16x1xf32> to vector<16x32xf32>
    %18 = arith.mulf %16, %17 : vector<16x32xf32>
    %c0_5 = arith.constant 0 : index
    %c0_6 = arith.constant 0 : index
    %19 = vector.load %arg2[%c0_5, %c0_6] : memref<1x32xf32, #tpu.memory_space<vmem>>, vector<1x32xf32>
    %20 = vector.broadcast %19 : vector<1x32xf32> to vector<16x32xf32>
    %21 = arith.mulf %18, %20 : vector<16x32xf32>
    %c0_7 = arith.constant 0 : index
    %c0_8 = arith.constant 0 : index
    %22 = vector.load %arg3[%c0_7, %c0_8] : memref<1x32xf32, #tpu.memory_space<vmem>>, vector<1x32xf32>
    %23 = vector.broadcast %22 : vector<1x32xf32> to vector<16x32xf32>
    %24 = arith.addf %21, %23 : vector<16x32xf32>
    %25 = arith.truncf %24 : vector<16x32xf32> to vector<16x32xbf16>
    %c0_9 = arith.constant 0 : index
    %c0_10 = arith.constant 0 : index
    %26 = vector.load %arg4[%c0_9, %c0_10] : memref<32x32xbf16, #tpu.memory_space<vmem>>, vector<32x32xbf16>
    %cst_11 = arith.constant dense<0.000000e+00> : vector<16x32xf32>
    %27 = tpu.matmul %25, %26, %cst_11 {dimension_numbers = #tpu.dot_dimension_numbers<[1], [0], [0], [1], [0, 0, 1, 1], [], []>} : vector<16x32xbf16>, vector<32x32xbf16>, vector<16x32xf32> -> vector<16x32xf32>
    %c0_12 = arith.constant 0 : index
    %c0_13 = arith.constant 0 : index
    %28 = vector.load %arg5[%c0_12, %c0_13] : memref<1x32xf32, #tpu.memory_space<vmem>>, vector<1x32xf32>
    %29 = vector.broadcast %28 : vector<1x32xf32> to vector<16x32xf32>
    %30 = arith.addf %27, %29 : vector<16x32xf32>
    %c0_14 = arith.constant 0 : index
    %c0_15 = arith.constant 0 : index
    %31 = vector.load %arg6[%c0_14, %c0_15] : memref<16x32xf32, #tpu.memory_space<vmem>>, vector<16x32xf32>
    tpu.vector_store %arg6[%c0_14, %c0_15], %30 {strides = array<i32>} : memref<16x32xf32, #tpu.memory_space<vmem>>, vector<16x32xf32>,
    return
  }
  func.func @transform_0(%arg0: i32) -> (i32, i32) {
    %c0_i32 = arith.constant 0 : i32
    %c0_i32_0 = arith.constant 0 : i32
    return %arg0, %c0_i32 : i32, i32
  }
  func.func @transform_1(%arg0: i32) -> (i32, i32) {
    %c0_i32 = arith.constant 0 : i32
    %c0_i32_0 = arith.constant 0 : i32
    %c0_i32_1 = arith.constant 0 : i32
    return %c0_i32, %c0_i32_0 : i32, i32
  }
  func.func @transform_2(%arg0: i32) -> (i32, i32) {
    %c0_i32 = arith.constant 0 : i32
    %c0_i32_0 = arith.constant 0 : i32
    %c0_i32_1 = arith.constant 0 : i32
    return %c0_i32, %c0_i32_0 : i32, i32
  }
  func.func @transform_3(%arg0: i32) -> (i32, i32) {
    %c0_i32 = arith.constant 0 : i32
    %c0_i32_0 = arith.constant 0 : i32
    %c0_i32_1 = arith.constant 0 : i32
    return %c0_i32, %c0_i32_0 : i32, i32
  }
  func.func @transform_4(%arg0: i32) -> (i32, i32) {
    %c0_i32 = arith.constant 0 : i32
    %c0_i32_0 = arith.constant 0 : i32
    %c0_i32_1 = arith.constant 0 : i32
    return %c0_i32, %c0_i32_0 : i32, i32
  }
  func.func @transform_5(%arg0: i32) -> (i32, i32) {
    %c0_i32 = arith.constant 0 : i32
    %c0_i32_0 = arith.constant 0 : i32
    return %arg0, %c0_i32 : i32, i32
  }
}

</mosaic_0001>

<llo_original>
// kernel: tpu_custom_call.1
$region0: #{tpu_custom_call.1}
  #allocation0 [shape = 'u32[]', space=smem, size = 0x4, offset = 0x4, fixed_abs, tag = 'smem constant byte address 0x4 - core index']
  #allocation1 [shape = 'u32[72,128]{1,0:T(1,128)}', space=vmem, size = 0x9000, scoped, tag = 'internal scratch']
  %s0 = inlined_call_operand.hbm [shape: f32[16,32], index: 0, kind: input, shape index: {}]
  %s1 = inlined_call_operand.hbm [shape: f32[1,32], index: 1, kind: input, shape index: {}]
  %s2 = inlined_call_operand.vmem [shape: f32[1,32], index: 2, kind: input, shape index: {}]
  %s3 = inlined_call_operand.hbm [shape: bf16[32,32], index: 3, kind: input, shape index: {}]
  %s4 = inlined_call_operand.vmem [shape: f32[1,32], index: 4, kind: input, shape index: {}]
  %s5 = inlined_call_operand.hbm [shape: f32[16,32], index: 5, kind: output, shape index: {}]
  %s6 = sld [smem:[#allocation0]]
  $region42: #{tpu_custom_call.1} parent=0
    _
  %s8 = ssub.s32 1, %s6
  %s9 = scalar_select 0, %s8, %s6
  $region1: #{tpu_custom_call.1} parent=0
    #allocation2 [shape = 'u8[8192]{0}', space=vmem, size = 0x2000, scoped, tag = 'input window, operand 0, single buffered']
    #allocation3 [shape = 's32[1]{0}', space=sflag, size = 0x4, scoped, tag = 'scoped memory for tpu_custom_call.1']
    #allocation4 [shape = 's32[1]{0}', space=sflag, size = 0x4, scoped, tag = 'scoped memory for tpu_custom_call.1']
    #allocation5 [shape = 'u8[512]{0}', space=vmem, size = 0x400, scoped, tag = 'input window, operand 1, single buffered']
    #allocation6 [shape = 's32[1]{0}', space=sflag, size = 0x4, scoped, tag = 'scoped memory for tpu_custom_call.1']
    #allocation7 [shape = 'u8[8192]{0}', space=vmem, size = 0x2000, scoped, tag = 'input window, operand 3, single buffered']
    #allocation8 [shape = 'u8[8192]{0}', space=vmem, size = 0x2000, scoped, tag = 'output window, operand 0, single buffered']
    %10 = vsyncpa [#allocation3], 0
    %11 = vsyncpa [#allocation6], 0
    %12 = vsyncpa [#allocation4], 0
    // Predicated region
    $region2: #{tpu_custom_call.1} parent=1 // pred_check
      _
    $region3: #{tpu_custom_call.1} parent=1 // pred_check_branch
      %14 = sbr.rel (0) target = $region5
    $region4: #{tpu_custom_call.1} parent=1 // pred_region
      %16 = vsyncadd [#allocation3], 0
      %s17 = sshll.u32 %s0, 4
      %s18 = int_to_ptr.hbm [resolvable:$true] %s17
      %s19 = sshll.u32 [#allocation2], 4
      %s20 = int_to_ptr.vmem [resolvable:$true] %s19
      %25 = dma.hbm_to_vmem [thread:$0]  %s18, 256, %s20, [#allocation3], 128, 128, 8
    $region5: #{tpu_custom_call.1} parent=1 // pred_fallthru
      _
    // Predicated region
    $region6: #{tpu_custom_call.1} parent=1 // pred_check
      _
    $region7: #{tpu_custom_call.1} parent=1 // pred_check_branch
      %27 = sbr.rel (0) target = $region9
    $region8: #{tpu_custom_call.1} parent=1 // pred_region
      %29 = vsyncadd [#allocation6], 0
      %s31 = sshll.u32 %s1, 4
      %s32 = int_to_ptr.hbm [resolvable:$true] %s31
      %s33 = sshll.u32 [#allocation5], 4
      %s34 = int_to_ptr.vmem [resolvable:$true] %s33
      %36 = dma.hbm_to_vmem [thread:$0]  %s32, 16, %s34, [#allocation6]
    $region9: #{tpu_custom_call.1} parent=1 // pred_fallthru
      _
    // Predicated region
    $region10: #{tpu_custom_call.1} parent=1 // pred_check
      _
    $region11: #{tpu_custom_call.1} parent=1 // pred_check_branch
      %38 = sbr.rel (0) target = $region13
    $region12: #{tpu_custom_call.1} parent=1 // pred_region
      _
    $region13: #{tpu_custom_call.1} parent=1 // pred_fallthru
      _
    // Predicated region
    $region14: #{tpu_custom_call.1} parent=1 // pred_check
      _
    $region15: #{tpu_custom_call.1} parent=1 // pred_check_branch
      %40 = sbr.rel (0) target = $region17
    $region16: #{tpu_custom_call.1} parent=1 // pred_region
      %42 = vsyncadd [#allocation6], 0
      %s43 = sshll.u32 %s3, 4
      %s44 = int_to_ptr.hbm [resolvable:$true] %s43
      %s45 = sshll.u32 [#allocation7], 4
      %s46 = int_to_ptr.vmem [resolvable:$true] %s45
      %51 = dma.hbm_to_vmem [thread:$0]  %s44, 256, %s46, [#allocation6], 64, 64, 4
    $region17: #{tpu_custom_call.1} parent=1 // pred_fallthru
      _
    // Predicated region
    $region18: #{tpu_custom_call.1} parent=1 // pred_check
      _
    $region19: #{tpu_custom_call.1} parent=1 // pred_check_branch
      %53 = sbr.rel (0) target = $region21
    $region20: #{tpu_custom_call.1} parent=1 // pred_region
      _
    $region21: #{tpu_custom_call.1} parent=1 // pred_fallthru
      _
    // Predicated region
    $region22: #{tpu_custom_call.1} parent=1 // pred_check
      _
    $region23: #{tpu_custom_call.1} parent=1 // pred_check_branch
      %55 = sbr.rel (0) target = $region25
    $region24: #{tpu_custom_call.1} parent=1 // pred_region
      %57 = dma.done [#allocation3], 256
    $region25: #{tpu_custom_call.1} parent=1 // pred_fallthru
      _
    // Predicated region
    $region26: #{tpu_custom_call.1} parent=1 // pred_check
      _
    $region27: #{tpu_custom_call.1} parent=1 // pred_check_branch
      %59 = sbr.rel (0) target = $region29
    $region28: #{tpu_custom_call.1} parent=1 // pred_region
      %61 = dma.done [#allocation6], 16
    $region29: #{tpu_custom_call.1} parent=1 // pred_fallthru
      _
    // Predicated region
    $region30: #{tpu_custom_call.1} parent=1 // pred_check
      _
    $region31: #{tpu_custom_call.1} parent=1 // pred_check_branch
      %63 = sbr.rel (0) target = $region33
    $region32: #{tpu_custom_call.1} parent=1 // pred_region
      %65 = dma.done [#allocation6], 256
    $region33: #{tpu_custom_call.1} parent=1 // pred_fallthru
      _
    %v67 = vld [vmem:[#allocation2] sm:$0xff]
    %v68 = vld [vmem:[#allocation2 + $0x8] sm:$0xff]
    %vm69 = vcmask 261120
    %v70 = vsel %vm69, %v67, 0.0
    %71 = vadd.xlane.f32.xlu0 %v70
    %v72 = vpop.xlane.xlu0 %71
    %v73 = vsel %vm69, %v68, 0.0
    %74 = vadd.xlane.f32.xlu0 %v73
    %v75 = vpop.xlane.xlu0 %74
    %v76 = vrcp.pop 32.0
    %v77 = vmul.f32 32.0, %v76
    %v78 = vsub.f32 1.0, %v77
    %v79 = vmul.f32 %v76, %v78
    %v80 = vadd.f32 %v76, %v79
    %vm81 = vweird.f32 %v76
    %v82 = vsel %vm81, %v76, %v80
    %v83 = vmul.f32 %v72, %v82
    %v84 = vmul.f32 %v75, %v82
    %v85 = vmul.f32 %v67, %v67
    %v86 = vmul.f32 %v68, %v68
    %v87 = vsel %vm69, %v85, 0.0
    %88 = vadd.xlane.f32.xlu0 %v87
    %v89 = vpop.xlane.xlu0 %88
    %v90 = vsel %vm69, %v86, 0.0
    %91 = vadd.xlane.f32.xlu0 %v90
    %v92 = vpop.xlane.xlu0 %91
    %v93 = vmul.f32 %v89, %v82
    %v94 = vmul.f32 %v92, %v82
    %v95 = vmul.f32 %v83, %v83
    %v96 = vmul.f32 %v84, %v84
    %v97 = vsub.f32 %v93, %v95
    %v98 = vsub.f32 %v94, %v96
    %v99 = vadd.f32 %v97, 1e-05
    %v100 = vadd.f32 %v98, 1e-05
    %v101 = vrsqrt.pop %v99
    %v102 = vmul.f32 %v101, %v99
    %v103 = vmul.f32 %v102, %v101
    %v104 = vmul.f32 0.5, %v103
    %v105 = vsub.f32 1.5, %v104
    %v106 = vmul.f32 %v101, %v105
    %vm107 = vweird.f32 %v99
    %vm108 = vweird.f32 %v101
    %vm109 = vmor %vm107, %vm108
    %v110 = vsel %vm109, %v101, %v106
    %v111 = vrsqrt.pop %v100
    %v112 = vmul.f32 %v111, %v100
    %v113 = vmul.f32 %v112, %v111
    %v114 = vmul.f32 0.5, %v113
    %v115 = vsub.f32 1.5, %v114
    %v116 = vmul.f32 %v111, %v115
    %vm117 = vweird.f32 %v100
    %vm118 = vweird.f32 %v111
    %vm119 = vmor %vm117, %vm118
    %v120 = vsel %vm119, %v111, %v116
    %v121 = vsub.f32 %v67, %v83
    %v122 = vsub.f32 %v68, %v84
    %v123 = vmul.f32 %v121, %v110
    %v124 = vmul.f32 %v122, %v120
    %v125 = vld [vmem:[#allocation5] sm:$0x1]
    %v127 = vperm.slane %v125, 0
    %v129 = vmul.f32 %v123, %v127
    %v130 = vmul.f32 %v124, %v127
    %v131 = vld [vmem:[%s2] sm:$0x1]
    %v133 = vperm.slane %v131, 0
    %v135 = vadd.f32 %v129, %v133
    %v136 = vadd.f32 %v130, %v133
    %v137 = vpack.c.bf16 %v136, %v135
    %v138 = vld [vmem:[#allocation7] sm:$0xf]
    %v139 = vld [vmem:[#allocation7 + $0x4] sm:$0xf]
    %v140 = vld [vmem:[#allocation7 + $0x8] sm:$0xf]
    %v141 = vld [vmem:[#allocation7 + $0xc] sm:$0xf]
    %v142 = vld [vmem:[%s4] sm:$0x1]
    %v144 = vperm.slane %v142, 0
    %v150 = vunpack.c.l.b16 %v138
    %v151 = vunpack.c.l.b16 %v139
    %v152 = vunpack.c.l.b16 %v140
    %v153 = vunpack.c.l.b16 %v141
    %v154 = vpack.c.b16 %v151, %v150
    %v155 = vpack.c.b16 %v153, %v152
    %v159 = vsel %vm69, %v137, 0
    %161 = vmatpush.bf16.msra.mxu0 0
    %162 = vmatpush.bf16.msra.mxu0 0
    %163 = vmatpush.bf16.msra.mxu0 0
    %164 = vmatpush.bf16.msra.mxu0 0
    %165 = vmatpush.bf16.msra.mxu0 0
    %166 = vmatpush.bf16.msra.mxu0 0
    %167 = vmatpush.bf16.msra.mxu0 %v155
    %168 = vmatpush.bf16.msra.mxu0 %v154
    %169 = vmatmul.bf16.gmra.mxu0 %v159
    %v170 = vpop.f32.mrf.mxu0
    %v171 = vadd.f32 %v144, %v170
    %v172 = vpop.f32.mrf.mxu0
    %v173 = vadd.f32 %v144, %v172
    %174 = vdwg.mxu0
    %175 = vst.msk [vmem:[#allocation8] sm:$0xff] %vm69, %v171
    %176 = vst.msk [vmem:[#allocation8 + $0x8] sm:$0xff] %vm69, %v173
    // Predicated region
    $region34: #{tpu_custom_call.1} parent=1 // pred_check
      _
    $region35: #{tpu_custom_call.1} parent=1 // pred_check_branch
      %178 = sbr.rel (0) target = $region37
    $region36: #{tpu_custom_call.1} parent=1 // pred_region
      %180 = vsyncadd [#allocation4], 0
      %s181 = sshll.u32 [#allocation8], 4
      %s182 = int_to_ptr.vmem [resolvable:$true] %s181
      %s183 = sshll.u32 %s5, 4
      %s184 = int_to_ptr.hbm [resolvable:$true] %s183
      %189 = dma.vmem_to_hbm [thread:$0]  %s182, 256, %s184, [#allocation4], 128, 128, 8
    $region37: #{tpu_custom_call.1} parent=1 // pred_fallthru
      _
    // Predicated region
    $region38: #{tpu_custom_call.1} parent=1 // pred_check
      _
    $region39: #{tpu_custom_call.1} parent=1 // pred_check_branch
      %191 = sbr.rel (0) target = $region41
    $region40: #{tpu_custom_call.1} parent=1 // pred_region
      %193 = dma.done [#allocation4], 256
    $region41: #{tpu_custom_call.1} parent=1 // pred_fallthru
      _
    %194 = vsyncpa [#allocation3], 1
    %195 = vsyncpa [#allocation6], 1
    %196 = vsyncpa [#allocation4], 1

</llo_original>
